<compile_context>
chip_gen: v7x
topology: tpu7x:2x2x1
jax: 0.10.0
libtpu: 0.0.40
codegen_flags: <defaults>
</compile_context>

<pallas_src>
import functools
import math

import numpy as np

import jax
import jax.numpy as jnp
from jax.experimental import pallas as pl
from jax.experimental.pallas import tpu as pltpu

_LOG_LOG_1E4 = math.log(math.log(10000.0))  # base really is ln(10000), as written in the module


def _pe_kernel(delta_ref, base_ref, o_ref):
    """One (TR, C) tile of the folded PE table.

    Element (r, c) holds sin(global_row * delta[c] + base[c]) with
      global_row = program_id(0)*TR + r
      delta[c]   = fold * wk(c)                                (host-precomputed, (1, C))
      base[c]    = pos_in_row(c) * wk(c) + phase(c)            (host-precomputed, (1, C))
    where phase = pi/2 on odd dims so cos(x) == sin(x + pi/2).
    Body = broadcast-FMA + one sin per element; no per-step iota-over-C / % / // / exp.
    """
    tr = o_ref.shape[0]
    row0 = pl.program_id(0) * tr
    r = (jax.lax.broadcasted_iota(jnp.int32, (tr, 1), 0) + row0).astype(jnp.float32)
    arg = r * delta_ref[...] + base_ref[...]          # (TR,1)*(1,C) + (1,C) -> (TR,C)
    o_ref[...] = jnp.sin(arg).astype(o_ref.dtype)


@functools.lru_cache(maxsize=None)
def _build_pe_table(hidden_dim, max_length, dtype_name):
    """Builds the full (1, max_length, hidden_dim) table once per config (cached)."""
    assert hidden_dim % 2 == 0, "hidden_dim must be even"
    out_dtype = np.dtype(dtype_name)

    # ---- lane-dense fold: C = fold*hidden_dim is always a multiple of 128 ----
    fold = 128 // math.gcd(hidden_dim, 128)
    C = fold * hidden_dim
    R = pl.cdiv(max_length, fold)          # folded rows (padded tail trimmed below)

    # ---- host-precomputed column-only vectors (f64 on host, stored as f32) ----
    c = np.arange(C)
    j = c % hidden_dim
    parity = j % 2
    two_k = (j - parity).astype(np.float64)
    wk = np.exp(-(two_k / float(hidden_dim)) * _LOG_LOG_1E4)     # 1 / ln(1e4)**(2k/D)
    phase = parity.astype(np.float64) * (np.pi / 2.0)            # cos(x) = sin(x + pi/2)
    pos_in_row = (c // hidden_dim).astype(np.float64)
    delta = jnp.asarray((fold * wk).astype(np.float32))[None, :]                  # (1, C)
    base = jnp.asarray((pos_in_row * wk + phase).astype(np.float32))[None, :]     # (1, C)

    # ---- row tiling over the folded row axis ----
    elem_bytes = out_dtype.itemsize
    row_align = max(8, 32 // elem_bytes)    # 8 rows/vreg for f32, 16 for bf16, 32 for 8-bit
    target_block_bytes = 4 << 20            # 4 MiB blocks; double-buffered -> 8 MiB VMEM
    min_grid_steps = 4                      # keep >=4 steps so v7x megacore has work to shard
    total_bytes = R * C * elem_bytes

    if R <= row_align or total_bytes <= (target_block_bytes // 2):
        tr, grid = R, (1,)                  # tiny table: one full-extent block
    else:
        budget_rows = max(
            row_align,
            (target_block_bytes // (C * elem_bytes)) // row_align * row_align,
        )
        split_rows = max(
            row_align,
            pl.cdiv(pl.cdiv(R, min_grid_steps), row_align) * row_align,
        )
        tr = min(budget_rows, split_rows)
        grid = (pl.cdiv(R, tr),)

    col_spec = pl.BlockSpec((1, C), lambda i: (0, 0))   # VMEM-resident, ~C*4 bytes each

    def build(delta_arr, base_arr):
        folded = pl.pallas_call(
            _pe_kernel,
            out_shape=jax.ShapeDtypeStruct((R, C), out_dtype),
            grid=grid,
            in_specs=[col_spec, col_spec],
            out_specs=pl.BlockSpec((tr, C), lambda i: (i, 0)),
            compiler_params=pltpu.CompilerParams(
                dimension_semantics=("parallel",),
                vmem_limit_bytes=32 << 20,
            ),
        )(delta_arr, base_arr)
        # Row-major (R, fold*D) == (R*fold, D): the unfold reshape is layout-free.
        pe = folded.reshape(R * fold, hidden_dim)
        if R * fold != max_length:
            pe = pe[:max_length]            # fuses with the kernel output under this jit
        return pe[None]                     # (1, max_length, hidden_dim)

    return jax.jit(build)(delta, base)


def sinusoidal_position_embedding(x, hidden_dim, max_length, out_dtype=jnp.float32):
    """Equivalent of SinusoidalPositionEmbedding(hidden_dim, max_length).forward(x)."""
    seq_len = int(x.shape[-1])
    assert seq_len <= max_length, "requested length exceeds max_length"
    # Table built once at max_length (like the module's __init__) and cached.
    pe = _build_pe_table(int(hidden_dim), int(max_length), np.dtype(out_dtype).name)
    if seq_len == max_length:
        return pe                           # no slice copy on the full-length path
    return pe[:, :seq_len]


def _reference(x, hidden_dim, max_length):
    # Pure-JAX reference mirroring the PyTorch module exactly.
    position = jnp.arange(max_length, dtype=jnp.float32)[:, None]
    wk = 1.0 / (
        math.log(10000.0)
        ** (jnp.arange(0, hidden_dim, 2, dtype=jnp.float32) / hidden_dim)
    )
    pe = jnp.zeros((max_length, hidden_dim), jnp.float32)
    pe = pe.at[:, 0::2].set(jnp.sin(position * wk))
    pe = pe.at[:, 1::2].set(jnp.cos(position * wk))
    pe = pe[None]
    return pe[:, : x.shape[-1]]


if __name__ == "__main__":
    hidden_dim = 32
    max_length = 16
    key = jax.random.PRNGKey(0)
    # x's last dim is the requested sequence length (per the module's forward).
    x = jax.random.normal(key, (2, hidden_dim, 8), dtype=jnp.float32)

    out = sinusoidal_position_embedding(x, hidden_dim, max_length)
    out = jax.block_until_ready(out)
    ref = _reference(x, hidden_dim, max_length)
    assert out.shape == ref.shape == (1, 8, hidden_dim)
    assert jnp.allclose(out, ref, atol=1e-5, rtol=1e-5), "mismatch vs reference (f32)"

    # Full-length request reuses the cached table (no rebuild, no slice copy).
    x_full = jax.random.normal(key, (2, hidden_dim, max_length), dtype=jnp.float32)
    out_full = jax.block_until_ready(
        sinusoidal_position_embedding(x_full, hidden_dim, max_length))
    ref_full = _reference(x_full, hidden_dim, max_length)
    assert out_full.shape == (1, max_length, hidden_dim)
    assert jnp.allclose(out_full, ref_full, atol=1e-5, rtol=1e-5), "mismatch (full length)"

    # bf16 output path (halves HBM writeback of the build; compute stays f32 in-kernel).
    out_bf16 = jax.block_until_ready(
        sinusoidal_position_embedding(x, hidden_dim, max_length, out_dtype=jnp.bfloat16))
    assert out_bf16.dtype == jnp.bfloat16
    assert jnp.allclose(out_bf16.astype(jnp.float32), ref, atol=2e-2, rtol=2e-2), \
        "mismatch vs reference (bf16)"

    print("KERNEL_OK")
</pallas_src>

<mosaic_0001>
module attributes {stable_mosaic.version = 11 : i64} {
  func.func @_pe_kernel(%arg0: i32, %arg1: memref<1x128xf32, #tpu.memory_space<vmem>>, %arg2: memref<1x128xf32, #tpu.memory_space<vmem>>, %arg3: memref<4x128xf32, #tpu.memory_space<vmem>>) attributes {dimension_semantics = [#tpu.dimension_semantics<parallel>], iteration_bounds = array<i64: 1>, scalar_prefetch = 0 : i64, scratch_operands = 0 : i64, tpu.core_type = #tpu.core_type<tc>, window_params = [{pipeline_mode = #tpu.pipeline_mode<synchronous>, transform_indices = @transform_0, window_bounds = array<i64: 1, 128>}, {pipeline_mode = #tpu.pipeline_mode<synchronous>, transform_indices = @transform_1, window_bounds = array<i64: 1, 128>}, {transform_indices = @transform_2, window_bounds = array<i64: 4, 128>}]} {
    %c4_i32 = arith.constant 4 : i32
    %0 = arith.muli %arg0, %c4_i32 : i32
    %1 = tpu.iota {dimensions = array<i32: 0>} : vector<4x1xi32>
    %2 = vector.broadcast %0 : i32 to vector<4x1xi32>
    %3 = arith.addi %1, %2 : vector<4x1xi32>
    %4 = arith.sitofp %3 : vector<4x1xi32> to vector<4x1xf32>
    %c0 = arith.constant 0 : index
    %c0_0 = arith.constant 0 : index
    %5 = vector.load %arg1[%c0, %c0_0] : memref<1x128xf32, #tpu.memory_space<vmem>>, vector<1x128xf32>
    %6 = vector.broadcast %4 : vector<4x1xf32> to vector<4x128xf32>
    %7 = vector.broadcast %5 : vector<1x128xf32> to vector<4x128xf32>
    %8 = arith.mulf %6, %7 : vector<4x128xf32>
    %c0_1 = arith.constant 0 : index
    %c0_2 = arith.constant 0 : index
    %9 = vector.load %arg2[%c0_1, %c0_2] : memref<1x128xf32, #tpu.memory_space<vmem>>, vector<1x128xf32>
    %10 = vector.broadcast %9 : vector<1x128xf32> to vector<4x128xf32>
    %11 = arith.addf %8, %10 : vector<4x128xf32>
    %12 = math.sin %11 : vector<4x128xf32>
    %c0_3 = arith.constant 0 : index
    %c0_4 = arith.constant 0 : index
    %13 = vector.load %arg3[%c0_3, %c0_4] : memref<4x128xf32, #tpu.memory_space<vmem>>, vector<4x128xf32>
    tpu.vector_store %arg3[%c0_3, %c0_4], %12 {strides = array<i32>} : memref<4x128xf32, #tpu.memory_space<vmem>>, vector<4x128xf32>,
    return
  }
  func.func @transform_0(%arg0: i32) -> (i32, i32) {
    %c0_i32 = arith.constant 0 : i32
    %c0_i32_0 = arith.constant 0 : i32
    %c0_i32_1 = arith.constant 0 : i32
    return %c0_i32, %c0_i32_0 : i32, i32
  }
  func.func @transform_1(%arg0: i32) -> (i32, i32) {
    %c0_i32 = arith.constant 0 : i32
    %c0_i32_0 = arith.constant 0 : i32
    %c0_i32_1 = arith.constant 0 : i32
    return %c0_i32, %c0_i32_0 : i32, i32
  }
  func.func @transform_2(%arg0: i32) -> (i32, i32) {
    %c0_i32 = arith.constant 0 : i32
    %c0_i32_0 = arith.constant 0 : i32
    return %arg0, %c0_i32 : i32, i32
  }
}

</mosaic_0001>

<llo_original>
// kernel: build.1
$region0: #{build.1}
  #allocation0 [shape = 'u32[]', space=smem, size = 0x4, offset = 0x4, fixed_abs, tag = 'smem constant byte address 0x4 - core index']
  #allocation1 [shape = 'u32[144,128]{1,0:T(1,128)}', space=vmem, size = 0x12000, scoped, tag = 'internal scratch']
  %s0 = inlined_call_operand.hbm [shape: f32[1,128], index: 0, kind: input, shape index: {}]
  %s1 = inlined_call_operand.vmem [shape: f32[1,128], index: 1, kind: input, shape index: {}]
  %s2 = inlined_call_operand.vmem [shape: f32[4,128], index: 2, kind: output, shape index: {}]
  %s3 = sld [smem:[#allocation0]]
  $region22: #{build.1} parent=0
    _
  %s5 = ssub.s32 1, %s3
  %s6 = scalar_select 0, %s5, %s3
  $region1: #{build.1} parent=0
    #allocation2 [shape = 'u8[512]{0}', space=vmem, size = 0x400, scoped, tag = 'input window, operand 0, single buffered']
    #allocation3 [shape = 's32[1]{0}', space=sflag, size = 0x4, scoped, tag = 'scoped memory for build.1']
    %7 = vsyncpa [#allocation3], 0
    // Predicated region
    $region2: #{build.1} parent=1 // pred_check
      _
    $region3: #{build.1} parent=1 // pred_check_branch
      %9 = sbr.rel (0) target = $region5
    $region4: #{build.1} parent=1 // pred_region
      %s11 = ssub.s32 16, 16
      %12 = vsyncadd [#allocation3], %s11
      %s14 = sshll.u32 [#allocation2], 4
      %s15 = int_to_ptr.vmem [resolvable:$true] %s14
      %17 = dma.hbm_to_vmem [thread:$0]  %s0, 16, %s15, [#allocation3]
    $region5: #{build.1} parent=1 // pred_fallthru
      _
    // Predicated region
    $region6: #{build.1} parent=1 // pred_check
      _
    $region7: #{build.1} parent=1 // pred_check_branch
      %19 = sbr.rel (0) target = $region9
    $region8: #{build.1} parent=1 // pred_region
      _
    $region9: #{build.1} parent=1 // pred_fallthru
      _
    // Predicated region
    $region10: #{build.1} parent=1 // pred_check
      _
    $region11: #{build.1} parent=1 // pred_check_branch
      %21 = sbr.rel (0) target = $region13
    $region12: #{build.1} parent=1 // pred_region
      %22 = dma.done [#allocation3], 16
    $region13: #{build.1} parent=1 // pred_fallthru
      _
    %s23 = smul.u32 0, 4
    %v24 = vlaneseq
    %v25 = vshrl.u32 %v24, 7
    %v26 = vstv %s23
    %v27 = vadd.s32 %v25, %v26
    %v28 = vcvt.s32.f32 %v27
    %v29 = vld [vmem:[#allocation2] sm:$0x1]
    %v31 = vlaneseq
    %v32 = vshrl.u32 %v31, 7
    %v33 = vsub.s32 0, %v32
    %v34 = vrot.slane %v29, %v33
    %v36 = vmul.f32 %v28, %v34
    %v37 = vld [vmem:[%s1] sm:$0x1]
    %v39 = vlaneseq
    %v40 = vshrl.u32 %v39, 7
    %v41 = vsub.s32 0, %v40
    %v42 = vrot.slane %v37, %v41
    %v44 = vadd.f32 %v36, %v42
    %v45 = vand.u32 2147483647, %v44
    %vm46 = vcmp.le.f32.partialorder %v45, 0.7853982
    %vm47 = vcmp.lt.s32.totalorder %v44, 0
    %v48 = vand.u32 %v44, 2139095040
    %v49 = vshrl.u32 %v48, 23
    %v50 = vsub.s32 %v49, 127
    %v51 = vand.u32 2147483647, %v44
    %v52 = vand.u32 %v51, 8388607
    %v53 = vor.u32 %v52, 8388608
    %v54 = vsub.s32 0, %v53
    %v55 = vadd.s32 %v50, 1
    %vm56 = vcmp.gt.s32.totalorder %v55, 0
    %v57 = vsel %vm56, %v55, 0
    %v58 = vshrl.u32 %v57, 5
    %v59 = vand.u32 %v57, 31
    %v60 = vsub.s32 32, %v59
    %v61 = vshrl.u32 683565275, %v60
    %v62 = vshll.u32 683565275, %v59
    %v63 = vshrl.u32 2475754826, %v60
    %v64 = vor.u32 %v62, %v63
    %v65 = vshll.u32 2475754826, %v59
    %v66 = vshrl.u32 2131351028, %v60
    %v67 = vor.u32 %v65, %v66
    %v68 = vshll.u32 2131351028, %v59
    %v69 = vshrl.u32 2102212464, %v60
    %v70 = vor.u32 %v68, %v69
    %v71 = vshll.u32 2102212464, %v59
    %v72 = vshrl.u32 920167782, %v60
    %v73 = vor.u32 %v71, %v72
    %v74 = vshll.u32 920167782, %v59
    %v75 = vshrl.u32 1326507024, %v60
    %v76 = vor.u32 %v74, %v75
    %vm77 = vcmp.lt.s32.totalorder %v58, 1
    %vm78 = vcmp.lt.s32.totalorder %v58, 2
    %vm79 = vcmp.lt.s32.totalorder %v58, 3
    %vm80 = vcmp.lt.s32.totalorder %v58, 4
    %v81 = vsel %vm77, %v61, %v64
    %v82 = vsel %vm80, %v70, 2102212464
    %v83 = vsel %vm79, %v67, %v82
    %v84 = vsel %vm78, %v81, %v83
    %v85 = vsel %vm77, %v64, %v67
    %v86 = vsel %vm80, %v73, 920167782
    %v87 = vsel %vm79, %v70, %v86
    %v88 = vsel %vm78, %v85, %v87
    %v89 = vsel %vm77, %v67, %v70
    %v90 = vsel %vm80, %v76, 1326507024
    %v91 = vsel %vm79, %v73, %v90
    %v92 = vsel %vm78, %v89, %v91
    %v93 = vshll.u32 %v53, 8
    %v94 = vmul.u32.u64.compose %v93, %v92
    %v95 = vextract.low.u32 %v94
    %v96 = vextract.high.u32 %v94
    %v97 = vmul.u32.u64.compose %v93, %v88
    %v98 = vextract.low.u32 %v97
    %v99 = vextract.high.u32 %v97
    %v100 = vmul.u32 %v93, %v84
    %v101 = vadd.s32 %v96, %v98
    %vm102 = vc.u32 %v96, %v98
    %v103 = vadd.s32 %v99, 1
    %v104 = vsel %vm102, %v103, %v99
    %v105 = vadd.s32 %v100, %v104
    %v106 = vadd.s32 %v105, 536870912
    %v107 = vshrl.u32 %v106, 30
    %v108 = vshll.u32 %v107, 30
    %v109 = vsub.s32 %v105, %v108
    %vm110 = vcmp.lt.s32.totalorder %v109, 0
    %v111 = vsub.s32 0, %v109
    %v112 = vsel %vm110, %v111, %v109
    %v113 = vclz %v112
    %v114 = vsub.s32 %v113, 2
    %vm115 = vcmp.gt.s32.totalorder 0, %v114
    %v116 = vsel %vm115, 0, %v114
    %v117 = vsub.s32 32, %v116
    %v118 = vshll.u32 %v109, %v116
    %v119 = vshrl.u32 %v101, %v117
    %v120 = vor.u32 %v118, %v119
    %v121 = vsub.s32 4294967266, %v116
    %v122 = vadd.s32 %v121, 127
    %v123 = vshll.u32 %v122, 23
    %v124 = vor.u32 4788187, %v123
    %v125 = vand.u32 2147483647, %v124
    %v127 = vcvt.s32.f32 %v120
    %v128 = vmul.f32 %v127, %v125
    %v129 = vxor.u32 %v128, 2147483648
    %v130 = vsel %vm47, %v129, %v128
    %v131 = vsub.s32 4, %v107
    %v132 = vsel %vm47, %v131, %v107
    %v133 = vsel %vm46, %v44, %v130
    %v134 = vsel %vm46, 0, %v132
    %v135 = vcosq.f32.pop %v133
    %v136 = vsinq.f32.pop %v133
    %vm137 = vweird.f32 %v44
    %v138 = vadd.s32 %v134, 3
    %v139 = vand.u32 %v138, 3
    %vm140 = vcmp.lt.s32.totalorder %v139, 2
    %vm141 = vcmp.eq.s32.totalorder %v139, 0
    %v142 = vxor.u32 %v136, 2147483648
    %v143 = vsel %vm141, %v135, %v142
    %vm144 = vcmp.eq.s32.totalorder %v139, 2
    %v145 = vxor.u32 %v135, 2147483648
    %v146 = vsel %vm144, %v145, %v136
    %v147 = vsel %vm140, %v143, %v146
    %v148 = vsel %vm137, nan, %v147
    %149 = vst [vmem:[%s2] sm:$0xf] %v148
    // Predicated region
    $region14: #{build.1} parent=1 // pred_check
      _
    $region15: #{build.1} parent=1 // pred_check_branch
      %151 = sbr.rel (0) target = $region17
    $region16: #{build.1} parent=1 // pred_region
      _
    $region17: #{build.1} parent=1 // pred_fallthru
      _
    // Predicated region
    $region18: #{build.1} parent=1 // pred_check
      _
    $region19: #{build.1} parent=1 // pred_check_branch
      %153 = sbr.rel (0) target = $region21
    $region20: #{build.1} parent=1 // pred_region
      _
    $region21: #{build.1} parent=1 // pred_fallthru
      _
    %154 = vsyncpa [#allocation3], 1

</llo_original>
